<compile_context>
chip_gen: v6e
topology: v6e:2x2x1
jax: 0.10.0
libtpu: 0.0.40
codegen_flags: <defaults>
</compile_context>

<pallas_src>
import jax
import jax.numpy as jnp
from jax.experimental import pallas as pl
from jax.experimental.pallas import tpu as pltpu


# ----------------------------- Pallas kernels ---------------------------------

def _proj_kernel_acc(h_ref, w_ref, o_ref, acc_ref):
    """One (tm, tn) output tile, accumulating in f32 over the K (hidden) grid axis."""
    @pl.when(pl.program_id(2) == 0)
    def _():
        acc_ref[...] = jnp.zeros_like(acc_ref)

    acc_ref[...] += jnp.dot(
        h_ref[...], w_ref[...], preferred_element_type=jnp.float32
    )

    @pl.when(pl.program_id(2) == pl.num_programs(2) - 1)
    def _():
        o_ref[...] = acc_ref[...].astype(o_ref.dtype)


def _proj_kernel_noacc(h_ref, w_ref, o_ref):
    """Single-K-step variant: no scratch round-trip, write the MXU result directly."""
    o_ref[...] = jnp.dot(
        h_ref[...], w_ref[...], preferred_element_type=jnp.float32
    ).astype(o_ref.dtype)


# ----------------------------- wrapper -----------------------------------------

def _round_up(x, m):
    return ((x + m - 1) // m) * m


def lm_head_projection(hidden, weight_hv, *, tm=256, tn=1024, tk=512, out_dtype=None):
    """hidden: [B, S, H]; weight_hv: [H, V] (transpose of nn.Linear.weight) -> [B, S, V].

    bf16 operands on the MXU, f32 accumulation, output in `out_dtype`
    (defaults to hidden.dtype).
    """
    B, S, H = hidden.shape
    Hw, V = weight_hv.shape
    assert H == Hw, (H, Hw)
    M = B * S
    out_dtype = hidden.dtype if out_dtype is None else out_dtype

    # Clamp tiles for small problems while keeping HW alignment:
    #   M axis -> multiple of 16 (bf16 sublane packing), K / N axes -> multiple of 128.
    tm = min(tm, _round_up(M, 16))
    tk = min(tk, _round_up(H, 128))
    tn = min(tn, _round_up(V, 128))

    Mp, Hp, Vp = _round_up(M, tm), _round_up(H, tk), _round_up(V, tn)

    # Cast once (not per grid step) and pad once.  Zero padding on H contributes
    # nothing to the dot product; M/V padding is sliced off after the call.
    h2d = hidden.reshape(M, H).astype(jnp.bfloat16)
    w = weight_hv.astype(jnp.bfloat16)
    if (Mp, Hp) != (M, H):
        h2d = jnp.pad(h2d, ((0, Mp - M), (0, Hp - H)))
    if (Hp, Vp) != (H, V):
        w = jnp.pad(w, ((0, Hp - H), (0, Vp - V)))

    grid = (pl.cdiv(Mp, tm), pl.cdiv(Vp, tn), pl.cdiv(Hp, tk))
    nk = grid[2]

    if nk == 1:
        kernel = _proj_kernel_noacc
        scratch = []
    else:
        kernel = _proj_kernel_acc
        scratch = [pltpu.VMEM((tm, tn), jnp.float32)]

    # VMEM budget: double-buffered bf16 input tiles + double-buffered output tiles
    # (+ f32 accumulator when K is tiled), with 2x headroom, capped < v7x's 64 MiB.
    out_bytes = jnp.dtype(out_dtype).itemsize
    vmem_need = (
        2 * (tm * tk + tk * tn) * 2
        + 2 * tm * tn * out_bytes
        + (0 if nk == 1 else tm * tn * 4)
    )
    vmem_limit = int(min(max(2 * vmem_need, 16 * 2**20), 48 * 2**20))

    out2d = pl.pallas_call(
        kernel,
        out_shape=jax.ShapeDtypeStruct((Mp, Vp), out_dtype),
        grid_spec=pltpu.PrefetchScalarGridSpec(
            num_scalar_prefetch=0,
            grid=grid,
            in_specs=[
                pl.BlockSpec((tm, tk), lambda i, j, k: (i, k)),
                pl.BlockSpec((tk, tn), lambda i, j, k: (k, j)),
            ],
            out_specs=pl.BlockSpec((tm, tn), lambda i, j, k: (i, j)),
            scratch_shapes=scratch,
        ),
        compiler_params=pltpu.CompilerParams(
            dimension_semantics=("parallel", "parallel", "arbitrary"),
            vmem_limit_bytes=vmem_limit,
        ),
    )(h2d, w)

    return out2d[:M, :V].reshape(B, S, V)


# ----------------------- frozen-encoder stub (plain JAX glue) ------------------

def stub_encoder(input_ids, embed_table, mix):
    """Deterministic stand-in for encoder(**inputs).last_hidden_state.

    input_ids: [B, S] int32 ; embed_table: [vocab_in, H] ; mix: [H, H]
    returns last_hidden_state [B, S, H].
    """
    emb = embed_table[input_ids]            # [B, S, H]
    return jnp.tanh(emb @ mix)              # [B, S, H]


def bert_finetune_forward(input_ids, params):
    hidden = stub_encoder(input_ids, params["embed"], params["mix"])
    return lm_head_projection(hidden, params["lin_w_hv"])


# ----------------------------------- main --------------------------------------

if __name__ == "__main__":
    B, S = 2, 8                 # batch, seq
    H = 32                      # lm_output_size
    V_OUT = 128                 # output_vocab_size
    V_IN = 64                   # stub encoder input vocab

    key = jax.random.PRNGKey(0)
    k_ids, k_emb, k_mix, k_lin = jax.random.split(key, 4)

    input_ids = jax.random.randint(k_ids, (B, S), 0, V_IN, dtype=jnp.int32)
    params = {
        "embed": jax.random.normal(k_emb, (V_IN, H), jnp.float32) * 0.02,
        "mix": jax.random.normal(k_mix, (H, H), jnp.float32) * 0.1,
        # nn.Linear(H, V_OUT, bias=False).weight has shape [V_OUT, H]; store transposed.
        "lin_w_hv": (jax.random.normal(k_lin, (V_OUT, H), jnp.float32) * 0.05).T,
    }

    logits = jax.block_until_ready(bert_finetune_forward(input_ids, params))
    assert logits.shape == (B, S, V_OUT), logits.shape

    # Cross-check against plain JAX (bf16 operands, f32 accumulation — same numerics
    # as the kernel) and loosely against the full-f32 reference.
    hidden = stub_encoder(input_ids, params["embed"], params["mix"])
    ref_bf16 = jnp.dot(
        hidden.reshape(-1, H).astype(jnp.bfloat16),
        params["lin_w_hv"].astype(jnp.bfloat16),
        preferred_element_type=jnp.float32,
    ).reshape(B, S, V_OUT)
    ref_f32 = hidden @ params["lin_w_hv"]
    assert jnp.allclose(logits, ref_bf16, atol=1e-4, rtol=1e-3)
    assert jnp.allclose(logits, ref_f32, atol=2e-3, rtol=5e-2)

    # Second check: non-tile-divisible shapes exercising padding + the K-accumulating
    # kernel path (H > tk forces multiple K steps).
    k_h, k_w = jax.random.split(jax.random.PRNGKey(1))
    B2, S2, H2, V2 = 2, 24, 640, 200
    hidden2 = jax.random.normal(k_h, (B2, S2, H2), jnp.float32)
    w2 = jax.random.normal(k_w, (H2, V2), jnp.float32) * 0.05
    out2 = jax.block_until_ready(lm_head_projection(hidden2, w2, tk=512))
    ref2 = jnp.dot(
        hidden2.reshape(-1, H2).astype(jnp.bfloat16),
        w2.astype(jnp.bfloat16),
        preferred_element_type=jnp.float32,
    ).reshape(B2, S2, V2)
    assert out2.shape == (B2, S2, V2), out2.shape
    assert jnp.allclose(out2, ref2, atol=5e-3, rtol=5e-3)

    print("KERNEL_OK")
</pallas_src>

<mosaic_0001>
module attributes {stable_mosaic.version = 11 : i64} {
  func.func @_proj_kernel_noacc(%arg0: i32, %arg1: i32, %arg2: i32, %arg3: memref<16x128xbf16, #tpu.memory_space<vmem>>, %arg4: memref<128x128xbf16, #tpu.memory_space<vmem>>, %arg5: memref<16x128xf32, #tpu.memory_space<vmem>>) attributes {dimension_semantics = [#tpu.dimension_semantics<parallel>, #tpu.dimension_semantics<parallel>, #tpu.dimension_semantics<arbitrary>], iteration_bounds = array<i64: 1, 1, 1>, scalar_prefetch = 0 : i64, scratch_operands = 0 : i64, tpu.core_type = #tpu.core_type<tc>, window_params = [{transform_indices = @transform_0, window_bounds = array<i64: 16, 128>}, {transform_indices = @transform_1, window_bounds = array<i64: 128, 128>}, {transform_indices = @transform_2, window_bounds = array<i64: 16, 128>}]} {
    %c0 = arith.constant 0 : index
    %c0_0 = arith.constant 0 : index
    %0 = vector.load %arg3[%c0, %c0_0] : memref<16x128xbf16, #tpu.memory_space<vmem>>, vector<16x128xbf16>
    %c0_1 = arith.constant 0 : index
    %c0_2 = arith.constant 0 : index
    %1 = vector.load %arg4[%c0_1, %c0_2] : memref<128x128xbf16, #tpu.memory_space<vmem>>, vector<128x128xbf16>
    %cst = arith.constant dense<0.000000e+00> : vector<16x128xf32>
    %2 = tpu.matmul %0, %1, %cst {dimension_numbers = #tpu.dot_dimension_numbers<[1], [0], [0], [1], [0, 0, 1, 1], [], []>} : vector<16x128xbf16>, vector<128x128xbf16>, vector<16x128xf32> -> vector<16x128xf32>
    %c0_3 = arith.constant 0 : index
    %c0_4 = arith.constant 0 : index
    %3 = vector.load %arg5[%c0_3, %c0_4] : memref<16x128xf32, #tpu.memory_space<vmem>>, vector<16x128xf32>
    tpu.vector_store %arg5[%c0_3, %c0_4], %2 {strides = array<i32>} : memref<16x128xf32, #tpu.memory_space<vmem>>, vector<16x128xf32>,
    return
  }
  func.func @transform_0(%arg0: i32, %arg1: i32, %arg2: i32) -> (i32, i32) {
    %c0_i32 = arith.constant 0 : i32
    return %arg0, %arg2 : i32, i32
  }
  func.func @transform_1(%arg0: i32, %arg1: i32, %arg2: i32) -> (i32, i32) {
    %c0_i32 = arith.constant 0 : i32
    return %arg2, %arg1 : i32, i32
  }
  func.func @transform_2(%arg0: i32, %arg1: i32, %arg2: i32) -> (i32, i32) {
    %c0_i32 = arith.constant 0 : i32
    return %arg0, %arg1 : i32, i32
  }
}

</mosaic_0001>

<llo_original>
// kernel: tpu_custom_call.1
$region0: #{tpu_custom_call.1}
  #allocation0 [shape = 'u32[]', space=smem, size = 0x4, offset = 0x4, fixed_abs, tag = 'smem constant byte address 0x4 - core index']
  #allocation1 [shape = 'u32[144,128]{1,0:T(1,128)}', space=vmem, size = 0x12000, scoped, tag = 'internal scratch']
  %s0 = inlined_call_operand.hbm [shape: bf16[16,128], index: 0, kind: input, shape index: {}]
  %s1 = inlined_call_operand.hbm [shape: bf16[128,128], index: 1, kind: input, shape index: {}]
  %s2 = inlined_call_operand.hbm [shape: f32[16,128], index: 2, kind: output, shape index: {}]
  %s3 = sld [smem:[#allocation0]]
  $region26: #{tpu_custom_call.1} parent=0
    _
  %s5 = ssub.s32 1, %s3
  %s6 = scalar_select 0, %s5, %s3
  $region1: #{tpu_custom_call.1} parent=0
    #allocation2 [shape = 'u8[4096]{0}', space=vmem, size = 0x1000, scoped, tag = 'input window, operand 0, single buffered']
    #allocation3 [shape = 's32[1]{0}', space=sflag, size = 0x4, scoped, tag = 'scoped memory for tpu_custom_call.1']
    #allocation4 [shape = 's32[1]{0}', space=sflag, size = 0x4, scoped, tag = 'scoped memory for tpu_custom_call.1']
    #allocation5 [shape = 'u8[32768]{0}', space=vmem, size = 0x8000, scoped, tag = 'input window, operand 1, single buffered']
    #allocation6 [shape = 's32[1]{0}', space=sflag, size = 0x4, scoped, tag = 'scoped memory for tpu_custom_call.1']
    #allocation7 [shape = 'u8[8192]{0}', space=vmem, size = 0x2000, scoped, tag = 'output window, operand 0, single buffered']
    %7 = vsyncpa [#allocation3], 0
    %8 = vsyncpa [#allocation6], 0
    %9 = vsyncpa [#allocation4], 0
    // Predicated region
    $region2: #{tpu_custom_call.1} parent=1 // pred_check
      _
    $region3: #{tpu_custom_call.1} parent=1 // pred_check_branch
      %11 = sbr.rel (0) target = $region5
    $region4: #{tpu_custom_call.1} parent=1 // pred_region
      %s13 = ssub.s32 128, 128
      %14 = vsyncadd [#allocation3], %s13
      %s15 = sshll.u32 [#allocation2], 4
      %s16 = int_to_ptr.vmem [resolvable:$true] %s15
      %21 = dma.hbm_to_vmem [thread:$0]  %s0, 128, %s16, [#allocation3], 64, 64, 4
    $region5: #{tpu_custom_call.1} parent=1 // pred_fallthru
      _
    // Predicated region
    $region6: #{tpu_custom_call.1} parent=1 // pred_check
      _
    $region7: #{tpu_custom_call.1} parent=1 // pred_check_branch
      %23 = sbr.rel (0) target = $region9
    $region8: #{tpu_custom_call.1} parent=1 // pred_region
      %s25 = ssub.s32 1024, 1024
      %26 = vsyncadd [#allocation6], %s25
      %s27 = sshll.u32 [#allocation5], 4
      %s28 = int_to_ptr.vmem [resolvable:$true] %s27
      %33 = dma.hbm_to_vmem [thread:$0]  %s1, 1024, %s28, [#allocation6], 64, 64, 4
    $region9: #{tpu_custom_call.1} parent=1 // pred_fallthru
      _
    // Predicated region
    $region10: #{tpu_custom_call.1} parent=1 // pred_check
      _
    $region11: #{tpu_custom_call.1} parent=1 // pred_check_branch
      %35 = sbr.rel (0) target = $region13
    $region12: #{tpu_custom_call.1} parent=1 // pred_region
      %36 = dma.done [#allocation3], 128
    $region13: #{tpu_custom_call.1} parent=1 // pred_fallthru
      _
    // Predicated region
    $region14: #{tpu_custom_call.1} parent=1 // pred_check
      _
    $region15: #{tpu_custom_call.1} parent=1 // pred_check_branch
      %38 = sbr.rel (0) target = $region17
    $region16: #{tpu_custom_call.1} parent=1 // pred_region
      %39 = dma.done [#allocation6], 1024
    $region17: #{tpu_custom_call.1} parent=1 // pred_fallthru
      _
    %v41 = vld [vmem:[#allocation2] sm:$0xf]
    %v42 = vld [vmem:[#allocation2 + $0x4] sm:$0xf]
    %v43 = vld [vmem:[#allocation5] sm:$0xf]
    %v44 = vld [vmem:[#allocation5 + $0x4] sm:$0xf]
    %v45 = vld [vmem:[#allocation5 + $0x8] sm:$0xf]
    %v46 = vld [vmem:[#allocation5 + $0xc] sm:$0xf]
    %v47 = vld [vmem:[#allocation5 + $0x10] sm:$0xf]
    %v48 = vld [vmem:[#allocation5 + $0x14] sm:$0xf]
    %v49 = vld [vmem:[#allocation5 + $0x18] sm:$0xf]
    %v50 = vld [vmem:[#allocation5 + $0x1c] sm:$0xf]
    %v51 = vld [vmem:[#allocation5 + $0x20] sm:$0xf]
    %v52 = vld [vmem:[#allocation5 + $0x24] sm:$0xf]
    %v53 = vld [vmem:[#allocation5 + $0x28] sm:$0xf]
    %v54 = vld [vmem:[#allocation5 + $0x2c] sm:$0xf]
    %v55 = vld [vmem:[#allocation5 + $0x30] sm:$0xf]
    %v56 = vld [vmem:[#allocation5 + $0x34] sm:$0xf]
    %v57 = vld [vmem:[#allocation5 + $0x38] sm:$0xf]
    %v58 = vld [vmem:[#allocation5 + $0x3c] sm:$0xf]
    %v61 = vunpack.c.l.b16 %v41
    %v62 = vunpack.c.l.b16 %v42
    %v63 = vpack.c.b16 %v62, %v61
    %v81 = vunpack.c.l.b16 %v43
    %v82 = vunpack.c.l.b16 %v44
    %v83 = vunpack.c.l.b16 %v45
    %v84 = vunpack.c.l.b16 %v46
    %v85 = vunpack.c.l.b16 %v47
    %v86 = vunpack.c.l.b16 %v48
    %v87 = vunpack.c.l.b16 %v49
    %v88 = vunpack.c.l.b16 %v50
    %v89 = vunpack.c.l.b16 %v51
    %v90 = vunpack.c.l.b16 %v52
    %v91 = vunpack.c.l.b16 %v53
    %v92 = vunpack.c.l.b16 %v54
    %v93 = vunpack.c.l.b16 %v55
    %v94 = vunpack.c.l.b16 %v56
    %v95 = vunpack.c.l.b16 %v57
    %v96 = vunpack.c.l.b16 %v58
    %v97 = vpack.c.b16 %v82, %v81
    %v98 = vpack.c.b16 %v84, %v83
    %v99 = vpack.c.b16 %v86, %v85
    %v100 = vpack.c.b16 %v88, %v87
    %v101 = vpack.c.b16 %v90, %v89
    %v102 = vpack.c.b16 %v92, %v91
    %v103 = vpack.c.b16 %v94, %v93
    %v104 = vpack.c.b16 %v96, %v95
    %113 = vmatprep.subr.bf16.mxu0 0
    %114 = vmatpush1.bf16.msra.mxu0 %v104
    %115 = vmatprep.subr.bf16.mxu0 0
    %116 = vmatpush1.bf16.msra.mxu0 %v103
    %117 = vmatprep.subr.bf16.mxu0 0
    %118 = vmatpush1.bf16.msra.mxu0 %v102
    %119 = vmatprep.subr.bf16.mxu0 0
    %120 = vmatpush1.bf16.msra.mxu0 %v101
    %121 = vmatprep.subr.bf16.mxu0 0
    %122 = vmatpush1.bf16.msra.mxu0 %v100
    %123 = vmatprep.subr.bf16.mxu0 0
    %124 = vmatpush1.bf16.msra.mxu0 %v99
    %125 = vmatprep.subr.bf16.mxu0 0
    %126 = vmatpush1.bf16.msra.mxu0 %v98
    %127 = vmatprep.subr.bf16.mxu0 0
    %128 = vmatpush1.bf16.msra.mxu0 %v97
    %129 = vmatprep.subr.bf16.mxu0 0
    %130 = vmatpush2.bf16.msra.mxu0 0
    %131 = vmatprep.subr.bf16.mxu0 0
    %132 = vmatpush2.bf16.msra.mxu0 0
    %133 = vmatprep.subr.bf16.mxu0 0
    %134 = vmatpush2.bf16.msra.mxu0 0
    %135 = vmatprep.subr.bf16.mxu0 0
    %136 = vmatpush2.bf16.msra.mxu0 0
    %137 = vmatprep.subr.bf16.mxu0 0
    %138 = vmatpush2.bf16.msra.mxu0 0
    %139 = vmatprep.subr.bf16.mxu0 0
    %140 = vmatpush2.bf16.msra.mxu0 0
    %141 = vmatprep.subr.bf16.mxu0 0
    %142 = vmatpush2.bf16.msra.mxu0 0
    %143 = vmatprep.subr.bf16.mxu0 0
    %144 = vmatpush2.bf16.msra.mxu0 0
    %145 = vmatprep.mubr.bf16.mxu0 0
    %146 = vmatmul.mubr.bf16.gmra.mxu0 %v63
    %v147 = vpop.f32.mrf.mxu0
    %v148 = vadd.f32 0.0, %v147
    %v149 = vpop.f32.mrf.mxu0
    %v150 = vpop.f32.mrf.mxu0
    %v151 = vadd.f32 0.0, %v150
    %v152 = vpop.f32.mrf.mxu0
    %153 = vdwg.mxu0
    %154 = vst [vmem:[#allocation7] sm:$0xff] %v148
    %155 = vst [vmem:[#allocation7 + $0x8] sm:$0xff] %v151
    // Predicated region
    $region18: #{tpu_custom_call.1} parent=1 // pred_check
      _
    $region19: #{tpu_custom_call.1} parent=1 // pred_check_branch
      %157 = sbr.rel (0) target = $region21
    $region20: #{tpu_custom_call.1} parent=1 // pred_region
      %s159 = ssub.s32 256, 256
      %160 = vsyncadd [#allocation4], %s159
      %s161 = sshll.u32 [#allocation7], 4
      %s162 = int_to_ptr.vmem [resolvable:$true] %s161
      %167 = dma.vmem_to_hbm [thread:$0]  %s162, 256, %s2, [#allocation4], 128, 128, 8
    $region21: #{tpu_custom_call.1} parent=1 // pred_fallthru
      _
    // Predicated region
    $region22: #{tpu_custom_call.1} parent=1 // pred_check
      _
    $region23: #{tpu_custom_call.1} parent=1 // pred_check_branch
      %169 = sbr.rel (0) target = $region25
    $region24: #{tpu_custom_call.1} parent=1 // pred_region
      %170 = dma.done [#allocation4], 256
    $region25: #{tpu_custom_call.1} parent=1 // pred_fallthru
      _
    %171 = vsyncpa [#allocation3], 1
    %172 = vsyncpa [#allocation6], 1
    %173 = vsyncpa [#allocation4], 1

</llo_original>
